<compile_context>
chip_gen: v7x
topology: tpu7x:2x2x1
jax: 0.10.0
libtpu: 0.0.40
codegen_flags: <defaults>
</compile_context>

<pallas_src>
import jax
import jax.numpy as jnp
from jax.experimental import pallas as pl
from jax.experimental.pallas import tpu as pltpu


def _relu_bias_add_transpose_kernel(x_ref, b_ref, o_ref):
    # x_ref: (tA, tC)   b_ref: (1, tA)   o_ref: (tC, tA)
    x_t = jnp.transpose(x_ref[...], (1, 0))          # 2-D tile transpose (XLU)
    o_ref[...] = jnp.maximum(b_ref[...], 0.0) + x_t  # relu(bias) broadcast over lanes + add


def _round_up(x, m):
    return ((x + m - 1) // m) * m


def model_forward(x1, bias, *, max_tile=512):
    """x1: (B, A, C) f32, bias: (A,) f32 -> relu(bias) + x1.transpose(0,2,1), shape (B, C, A)."""
    B, A, C = x1.shape
    assert bias.shape == (A,)

    # 128-aligned tiles, capped at 512 (>= ~85% of HBM roofline; ~4 MiB live VMEM
    # with double buffering, comfortably inside v7x's 64 MiB per-TC VMEM).
    tA = min(max_tile, _round_up(A, 128))
    tC = min(max_tile, _round_up(C, 128))
    A_p = _round_up(A, tA)
    C_p = _round_up(C, tC)

    needs_pad = (A_p != A) or (C_p != C)
    x_p = jnp.pad(x1, ((0, 0), (0, A_p - A), (0, C_p - C))) if needs_pad else x1
    b_p = (jnp.pad(bias, (0, A_p - A)) if A_p != A else bias).reshape(1, A_p)

    grid = (B, A_p // tA, C_p // tC)

    out_p = pl.pallas_call(
        _relu_bias_add_transpose_kernel,
        out_shape=jax.ShapeDtypeStruct((B, C_p, A_p), jnp.float32),
        grid=grid,
        in_specs=[
            # Squeeze the batch dim: kernel sees a clean 2-D (tA, tC) tile.
            pl.BlockSpec((pl.Squeezed(), tA, tC), lambda b, a, c: (b, a, c)),
            # Bias block index is constant over b and c -> stays resident in VMEM.
            pl.BlockSpec((1, tA), lambda b, a, c: (0, a)),
        ],
        # The permute(0, 2, 1) lives in the output index_map: (b, a, c) -> (b, c, a).
        out_specs=pl.BlockSpec((pl.Squeezed(), tC, tA), lambda b, a, c: (b, c, a)),
        compiler_params=pltpu.CompilerParams(
            dimension_semantics=("parallel", "parallel", "parallel"),
            vmem_limit_bytes=32 * 1024 * 1024,
        ),
        cost_estimate=pl.CostEstimate(
            flops=2 * B * A_p * C_p,
            transcendentals=0,
            bytes_accessed=2 * B * A_p * C_p * 4 + A_p * 4,
        ),
    )(x_p, b_p)

    return out_p[:, :C, :A] if needs_pad else out_p


if __name__ == "__main__":
    key = jax.random.PRNGKey(0)
    k_x, k_b, k_x2, k_b2 = jax.random.split(key, 4)

    # --- Case 1: literal module shape: x1 = torch.randn(1, 2, 2), bias from nn.Linear(2, 2) ---
    B, A, C = 1, 2, 2
    x1 = jax.random.normal(k_x, (B, A, C), dtype=jnp.float32)
    in_features = 2
    bound = 1.0 / jnp.sqrt(jnp.float32(in_features))
    bias = jax.random.uniform(k_b, (A,), minval=-bound, maxval=bound, dtype=jnp.float32)
    # (Linear weight is unused in this forward pass, so it is not materialized.)

    out = jax.block_until_ready(model_forward(x1, bias))
    ref = jnp.maximum(bias, 0.0)[None, None, :] + jnp.transpose(x1, (0, 2, 1))
    assert out.shape == (B, C, A)
    assert jnp.allclose(out, ref, atol=1e-6, rtol=1e-6)

    # --- Case 2: larger shape to exercise the multi-tile pipelined path (grid = (2, 1, 2)) ---
    B2, A2, C2 = 2, 256, 640
    x_big = jax.random.normal(k_x2, (B2, A2, C2), dtype=jnp.float32)
    bias_big = jax.random.uniform(k_b2, (A2,), minval=-1.0, maxval=1.0, dtype=jnp.float32)

    out_big = jax.block_until_ready(model_forward(x_big, bias_big))
    ref_big = jnp.maximum(bias_big, 0.0)[None, None, :] + jnp.transpose(x_big, (0, 2, 1))
    assert out_big.shape == (B2, C2, A2)
    assert jnp.allclose(out_big, ref_big, atol=1e-6, rtol=1e-6)

    print("KERNEL_OK")
</pallas_src>

<mosaic_0001>
module attributes {stable_mosaic.version = 11 : i64} {
  func.func @_relu_bias_add_transpose_kernel(%arg0: i32, %arg1: i32, %arg2: i32, %arg3: memref<1x128x128xf32, #tpu.memory_space<vmem>>, %arg4: memref<1x128xf32, #tpu.memory_space<vmem>>, %arg5: memref<1x128x128xf32, #tpu.memory_space<vmem>>) attributes {dimension_semantics = [#tpu.dimension_semantics<parallel>, #tpu.dimension_semantics<parallel>, #tpu.dimension_semantics<parallel>], iteration_bounds = array<i64: 1, 1, 1>, scalar_prefetch = 0 : i64, scratch_operands = 0 : i64, tpu.core_type = #tpu.core_type<tc>, window_params = [{transform_indices = @transform_0, window_bounds = array<i64: 1, 128, 128>}, {transform_indices = @transform_1, window_bounds = array<i64: 1, 128>}, {transform_indices = @transform_2, window_bounds = array<i64: 1, 128, 128>}]} {
    %c0 = arith.constant 0 : index
    %c0_0 = arith.constant 0 : index
    %c0_1 = arith.constant 0 : index
    %0 = vector.load %arg3[%c0, %c0_0, %c0_1] : memref<1x128x128xf32, #tpu.memory_space<vmem>>, vector<1x128x128xf32>
    %1 = vector.shape_cast %0 : vector<1x128x128xf32> to vector<128x128xf32>
    %2 = tpu.transpose %1, [1, 0] : vector<128x128xf32> -> vector<128x128xf32>
    %c0_2 = arith.constant 0 : index
    %c0_3 = arith.constant 0 : index
    %3 = vector.load %arg4[%c0_2, %c0_3] : memref<1x128xf32, #tpu.memory_space<vmem>>, vector<1x128xf32>
    %cst = arith.constant 0.000000e+00 : f32
    %4 = vector.broadcast %cst : f32 to vector<1x128xf32>
    %5 = arith.maximumf %3, %4 : vector<1x128xf32>
    %6 = vector.broadcast %5 : vector<1x128xf32> to vector<128x128xf32>
    %7 = arith.addf %6, %2 : vector<128x128xf32>
    %c0_4 = arith.constant 0 : index
    %c0_5 = arith.constant 0 : index
    %c0_6 = arith.constant 0 : index
    %8 = vector.load %arg5[%c0_4, %c0_5, %c0_6] : memref<1x128x128xf32, #tpu.memory_space<vmem>>, vector<1x128x128xf32>
    %9 = vector.shape_cast %8 : vector<1x128x128xf32> to vector<128x128xf32>
    %10 = vector.shape_cast %7 : vector<128x128xf32> to vector<1x128x128xf32>
    tpu.vector_store %arg5[%c0_4, %c0_5, %c0_6], %10 {strides = array<i32>} : memref<1x128x128xf32, #tpu.memory_space<vmem>>, vector<1x128x128xf32>,
    return
  }
  func.func @transform_0(%arg0: i32, %arg1: i32, %arg2: i32) -> (i32, i32, i32) {
    %c0_i32 = arith.constant 0 : i32
    return %arg0, %arg1, %arg2 : i32, i32, i32
  }
  func.func @transform_1(%arg0: i32, %arg1: i32, %arg2: i32) -> (i32, i32) {
    %c0_i32 = arith.constant 0 : i32
    %c0_i32_0 = arith.constant 0 : i32
    return %c0_i32, %arg1 : i32, i32
  }
  func.func @transform_2(%arg0: i32, %arg1: i32, %arg2: i32) -> (i32, i32, i32) {
    %c0_i32 = arith.constant 0 : i32
    return %arg0, %arg2, %arg1 : i32, i32, i32
  }
}

</mosaic_0001>

<llo_original>
// kernel: tpu_custom_call.1
$region0: #{tpu_custom_call.1}
  #allocation0 [shape = 'u32[]', space=smem, size = 0x4, offset = 0x4, fixed_abs, tag = 'smem constant byte address 0x4 - core index']
  #allocation1 [shape = 'u32[144,128]{1,0:T(1,128)}', space=vmem, size = 0x12000, scoped, tag = 'internal scratch']
  %s0 = inlined_call_operand.hbm [shape: f32[1,128,128], index: 0, kind: input, shape index: {}]
  %s1 = inlined_call_operand.vmem [shape: f32[1,128], index: 1, kind: input, shape index: {}]
  %s2 = inlined_call_operand.hbm [shape: f32[1,128,128], index: 2, kind: output, shape index: {}]
  %s3 = sld [smem:[#allocation0]]
  $region22: #{tpu_custom_call.1} parent=0
    _
  %s5 = ssub.s32 1, %s3
  %s6 = scalar_select 0, %s5, %s3
  $region1: #{tpu_custom_call.1} parent=0
    #allocation2 [shape = 'u8[65536]{0}', space=vmem, size = 0x10000, scoped, tag = 'input window, operand 0, single buffered']
    #allocation3 [shape = 's32[1]{0}', space=sflag, size = 0x4, scoped, tag = 'scoped memory for tpu_custom_call.1']
    #allocation4 [shape = 's32[1]{0}', space=sflag, size = 0x4, scoped, tag = 'scoped memory for tpu_custom_call.1']
    #allocation5 [shape = 'u8[65536]{0}', space=vmem, size = 0x10000, scoped, tag = 'output window, operand 0, single buffered']
    %7 = vsyncpa [#allocation3], 0
    %8 = vsyncpa [#allocation4], 0
    // Predicated region
    $region2: #{tpu_custom_call.1} parent=1 // pred_check
      _
    $region3: #{tpu_custom_call.1} parent=1 // pred_check_branch
      %10 = sbr.rel (0) target = $region5
    $region4: #{tpu_custom_call.1} parent=1 // pred_region
      %s12 = ssub.s32 2048, 2048
      %13 = vsyncadd [#allocation3], %s12
      %s14 = sshll.u32 [#allocation2], 4
      %s15 = int_to_ptr.vmem [resolvable:$true] %s14
      %20 = dma.hbm_to_vmem [thread:$0]  %s0, 2048, %s15, [#allocation3], 128, 128, 8
    $region5: #{tpu_custom_call.1} parent=1 // pred_fallthru
      _
    // Predicated region
    $region6: #{tpu_custom_call.1} parent=1 // pred_check
      _
    $region7: #{tpu_custom_call.1} parent=1 // pred_check_branch
      %22 = sbr.rel (0) target = $region9
    $region8: #{tpu_custom_call.1} parent=1 // pred_region
      _
    $region9: #{tpu_custom_call.1} parent=1 // pred_fallthru
      _
    // Predicated region
    $region10: #{tpu_custom_call.1} parent=1 // pred_check
      _
    $region11: #{tpu_custom_call.1} parent=1 // pred_check_branch
      %24 = sbr.rel (0) target = $region13
    $region12: #{tpu_custom_call.1} parent=1 // pred_region
      %25 = dma.done [#allocation3], 2048
    $region13: #{tpu_custom_call.1} parent=1 // pred_fallthru
      _
    %v26 = vld [vmem:[#allocation2] sm:$0xff]
    %v27 = vld [vmem:[#allocation2 + $0x8] sm:$0xff]
    %v28 = vld [vmem:[#allocation2 + $0x10] sm:$0xff]
    %v29 = vld [vmem:[#allocation2 + $0x18] sm:$0xff]
    %v30 = vld [vmem:[#allocation2 + $0x20] sm:$0xff]
    %v31 = vld [vmem:[#allocation2 + $0x28] sm:$0xff]
    %v32 = vld [vmem:[#allocation2 + $0x30] sm:$0xff]
    %v33 = vld [vmem:[#allocation2 + $0x38] sm:$0xff]
    %v34 = vld [vmem:[#allocation2 + $0x40] sm:$0xff]
    %v35 = vld [vmem:[#allocation2 + $0x48] sm:$0xff]
    %v36 = vld [vmem:[#allocation2 + $0x50] sm:$0xff]
    %v37 = vld [vmem:[#allocation2 + $0x58] sm:$0xff]
    %v38 = vld [vmem:[#allocation2 + $0x60] sm:$0xff]
    %v39 = vld [vmem:[#allocation2 + $0x68] sm:$0xff]
    %v40 = vld [vmem:[#allocation2 + $0x70] sm:$0xff]
    %v41 = vld [vmem:[#allocation2 + $0x78] sm:$0xff]
    %42 = vxpose.xlu0.b32.start [1/16] %v26, 128
    %43 = vxpose.xlu0.b32.cont [2/16] %v27, 128
    %44 = vxpose.xlu0.b32.cont [3/16] %v28, 128
    %45 = vxpose.xlu0.b32.cont [4/16] %v29, 128
    %46 = vxpose.xlu0.b32.cont [5/16] %v30, 128
    %47 = vxpose.xlu0.b32.cont [6/16] %v31, 128
    %48 = vxpose.xlu0.b32.cont [7/16] %v32, 128
    %49 = vxpose.xlu0.b32.cont [8/16] %v33, 128
    %50 = vxpose.xlu0.b32.cont [9/16] %v34, 128
    %51 = vxpose.xlu0.b32.cont [10/16] %v35, 128
    %52 = vxpose.xlu0.b32.cont [11/16] %v36, 128
    %53 = vxpose.xlu0.b32.cont [12/16] %v37, 128
    %54 = vxpose.xlu0.b32.cont [13/16] %v38, 128
    %55 = vxpose.xlu0.b32.cont [14/16] %v39, 128
    %56 = vxpose.xlu0.b32.cont [15/16] %v40, 128
    %57 = vxpose.xlu0.b32.end [16/16] %v41, 128
    %v58 = vpop.trf.xlu0
    %v59 = vpop.trf.xlu0
    %v60 = vpop.trf.xlu0
    %v61 = vpop.trf.xlu0
    %v62 = vpop.trf.xlu0
    %v63 = vpop.trf.xlu0
    %v64 = vpop.trf.xlu0
    %v65 = vpop.trf.xlu0
    %v66 = vpop.trf.xlu0
    %v67 = vpop.trf.xlu0
    %v68 = vpop.trf.xlu0
    %v69 = vpop.trf.xlu0
    %v70 = vpop.trf.xlu0
    %v71 = vpop.trf.xlu0
    %v72 = vpop.trf.xlu0
    %v73 = vpop.trf.xlu0
    %v74 = vld [vmem:[%s1] sm:$0x1]
    %v75 = vmax.f32 %v74, 0.0
    %v77 = vlaneseq
    %v78 = vshrl.u32 %v77, 7
    %v79 = vsub.s32 0, %v78
    %v80 = vrot.slane %v75, %v79
    %v82 = vadd.f32 %v80, %v58
    %v83 = vadd.f32 %v80, %v59
    %v84 = vadd.f32 %v80, %v60
    %v85 = vadd.f32 %v80, %v61
    %v86 = vadd.f32 %v80, %v62
    %v87 = vadd.f32 %v80, %v63
    %v88 = vadd.f32 %v80, %v64
    %v89 = vadd.f32 %v80, %v65
    %v90 = vadd.f32 %v80, %v66
    %v91 = vadd.f32 %v80, %v67
    %v92 = vadd.f32 %v80, %v68
    %v93 = vadd.f32 %v80, %v69
    %v94 = vadd.f32 %v80, %v70
    %v95 = vadd.f32 %v80, %v71
    %v96 = vadd.f32 %v80, %v72
    %v97 = vadd.f32 %v80, %v73
    %98 = vst [vmem:[#allocation5] sm:$0xff] %v82
    %99 = vst [vmem:[#allocation5 + $0x8] sm:$0xff] %v83
    %100 = vst [vmem:[#allocation5 + $0x10] sm:$0xff] %v84
    %101 = vst [vmem:[#allocation5 + $0x18] sm:$0xff] %v85
    %102 = vst [vmem:[#allocation5 + $0x20] sm:$0xff] %v86
    %103 = vst [vmem:[#allocation5 + $0x28] sm:$0xff] %v87
    %104 = vst [vmem:[#allocation5 + $0x30] sm:$0xff] %v88
    %105 = vst [vmem:[#allocation5 + $0x38] sm:$0xff] %v89
    %106 = vst [vmem:[#allocation5 + $0x40] sm:$0xff] %v90
    %107 = vst [vmem:[#allocation5 + $0x48] sm:$0xff] %v91
    %108 = vst [vmem:[#allocation5 + $0x50] sm:$0xff] %v92
    %109 = vst [vmem:[#allocation5 + $0x58] sm:$0xff] %v93
    %110 = vst [vmem:[#allocation5 + $0x60] sm:$0xff] %v94
    %111 = vst [vmem:[#allocation5 + $0x68] sm:$0xff] %v95
    %112 = vst [vmem:[#allocation5 + $0x70] sm:$0xff] %v96
    %113 = vst [vmem:[#allocation5 + $0x78] sm:$0xff] %v97
    // Predicated region
    $region14: #{tpu_custom_call.1} parent=1 // pred_check
      _
    $region15: #{tpu_custom_call.1} parent=1 // pred_check_branch
      %115 = sbr.rel (0) target = $region17
    $region16: #{tpu_custom_call.1} parent=1 // pred_region
      %s117 = ssub.s32 2048, 2048
      %118 = vsyncadd [#allocation4], %s117
      %s119 = sshll.u32 [#allocation5], 4
      %s120 = int_to_ptr.vmem [resolvable:$true] %s119
      %125 = dma.vmem_to_hbm [thread:$0]  %s120, 2048, %s2, [#allocation4], 128, 128, 8
    $region17: #{tpu_custom_call.1} parent=1 // pred_fallthru
      _
    // Predicated region
    $region18: #{tpu_custom_call.1} parent=1 // pred_check
      _
    $region19: #{tpu_custom_call.1} parent=1 // pred_check_branch
      %127 = sbr.rel (0) target = $region21
    $region20: #{tpu_custom_call.1} parent=1 // pred_region
      %128 = dma.done [#allocation4], 2048
    $region21: #{tpu_custom_call.1} parent=1 // pred_fallthru
      _
    %129 = vsyncpa [#allocation3], 1
    %130 = vsyncpa [#allocation4], 1

</llo_original>
